<compile_context>
chip_gen: v5e
topology: v5e:2x2
jax: 0.10.0
libtpu: 0.0.40
codegen_flags: <defaults>
</compile_context>

<pallas_src>
import jax
import jax.numpy as jnp
from jax.experimental import pallas as pl
from jax.experimental.pallas import tpu as pltpu


def _projector_kernel(x_ref, w_ref, b_ref, o_ref):
    # x_ref: [tm, H], w_ref: [H, tn] (pre-transposed), b_ref: [1, tn]
    x = x_ref[...]
    w = w_ref[...]
    if x.dtype != w.dtype:
        # In-VMEM cast (VPU), avoids a wrapper-side HBM read+write pass.
        x = x.astype(w.dtype)
    acc = jnp.dot(x, w, preferred_element_type=jnp.float32)  # MXU, f32 acc
    o_ref[...] = (acc + b_ref[...].astype(jnp.float32)).astype(o_ref.dtype)


def prepare_projector_params(weight, bias, compute_dtype=jnp.bfloat16):
    """One-time (model-load) parameter transform.

    weight: [P, H] PyTorch nn.Linear layout -> returns [H, P] in compute_dtype.
    bias:   [P] -> [1, P] float32 (bias add stays f32 in-kernel).
    """
    w_hp = jnp.asarray(weight).T
    if compute_dtype is not None:
        w_hp = w_hp.astype(compute_dtype)
    b2d = jnp.asarray(bias).reshape(1, -1).astype(jnp.float32)
    return w_hp, b2d


def _pick_tiles(M, P, itemsize):
    # tm: 512 rows for bf16 (halves per-step overhead vs 256); cap at 256 for
    # >=4-byte data so v5e's 16 MiB scoped VMEM default still holds.
    cap_m = 256 if itemsize >= 4 else 512
    tm = cap_m if M >= cap_m else M
    # tn: stripe P so (a) the next stripe's weight DMA hides under the current
    # stripe's compute even at grid_m == 1, and (b) the outer axis has extent
    # >= 2 for v7x megacore sharding of the weight.
    if P % 128 != 0 or P <= 512:
        tn = P
    elif M <= 256 and P % 512 == 0:
        tn = 512                       # small-M (single image) path
    elif P % 1024 == 0:
        tn = 512 if (itemsize >= 4 and P % 512 == 0) else 1024
    elif P % 512 == 0:
        tn = 512
    else:
        tn = P
    return tm, tn


def paligemma_mm_projector(image_features, w_hp, bias, *, tm=None, tn=None,
                           out_dtype=None):
    """image_features: [B, S, H] (ideally bf16 upstream);
    w_hp: [H, P] pre-transposed/pre-cast weight (see prepare_projector_params);
    bias: [P] or [1, P]."""
    B, S, H = image_features.shape
    Hw, P = w_hp.shape
    assert Hw == H, f"w_hp must be [H, P] (got {w_hp.shape}, H={H}); " \
                    "use prepare_projector_params on the PyTorch [P, H] weight"
    bias2d = bias if bias.ndim == 2 else bias.reshape(1, P)
    M = B * S
    if out_dtype is None:
        out_dtype = image_features.dtype

    itemsize = max(jnp.dtype(image_features.dtype).itemsize,
                   jnp.dtype(w_hp.dtype).itemsize)
    auto_tm, auto_tn = _pick_tiles(M, P, itemsize)
    tm = auto_tm if tm is None else tm
    tn = auto_tn if tn is None else tn
    assert tn == P or tn % 128 == 0, f"tn={tn} must be a multiple of 128 or == P"
    assert tm == M or tm % 8 == 0, f"tm={tm} must be a multiple of 8 or == M"

    x2d = image_features.reshape(M, H)   # no padding copy: cdiv grid + masked tail

    grid_p = pl.cdiv(P, tn)   # OUTER: weight stripe DMA'd once, reused over M
    grid_m = pl.cdiv(M, tm)

    cost = pl.CostEstimate(
        flops=2 * M * H * P,
        transcendentals=0,
        bytes_accessed=(grid_p * x2d.size * x2d.dtype.itemsize
                        + w_hp.size * w_hp.dtype.itemsize
                        + bias2d.size * bias2d.dtype.itemsize
                        + M * P * jnp.dtype(out_dtype).itemsize),
    )

    out2d = pl.pallas_call(
        _projector_kernel,
        out_shape=jax.ShapeDtypeStruct((M, P), out_dtype),
        grid_spec=pltpu.PrefetchScalarGridSpec(
            num_scalar_prefetch=0,
            grid=(grid_p, grid_m),
            in_specs=[
                # x tile: depends only on the inner (M) axis.
                pl.BlockSpec((tm, H), lambda j, i: (i, 0)),
                # weight stripe [H, tn]: depends only on the outer (P) axis.
                pl.BlockSpec((H, tn), lambda j, i: (0, j)),
                # bias stripe.
                pl.BlockSpec((1, tn), lambda j, i: (0, j)),
            ],
            out_specs=pl.BlockSpec((tm, tn), lambda j, i: (i, j)),
        ),
        compiler_params=pltpu.CompilerParams(
            dimension_semantics=("parallel", "parallel"),
        ),
        cost_estimate=cost,
    )(x2d, w_hp, bias2d)

    return out2d.reshape(B, S, P)


if __name__ == "__main__":
    # Small synthetic config: vision hidden_size=32, projection_dim=64,
    # batch=2, num_patches(seq)=8.
    B, S, H, P = 2, 8, 32, 64

    key = jax.random.PRNGKey(0)
    kx, kw, kb = jax.random.split(key, 3)

    image_features = jax.random.normal(kx, (B, S, H), dtype=jnp.float32)
    # Deterministic nn.Linear-style init (uniform in +-1/sqrt(H)).
    bound = 1.0 / (H ** 0.5)
    weight = jax.random.uniform(
        kw, (P, H), minval=-bound, maxval=bound, dtype=jnp.float32)
    bias = jax.random.uniform(
        kb, (P,), minval=-bound, maxval=bound, dtype=jnp.float32)

    # One-time parameter transform ("model load"): [P,H] -> [H,P], bf16.
    w_hp, b2d = prepare_projector_params(weight, bias, compute_dtype=jnp.bfloat16)
    # Activations arrive bf16 upstream; no per-call casts in the hot path.
    x_bf16 = image_features.astype(jnp.bfloat16)

    out = paligemma_mm_projector(x_bf16, w_hp, b2d)
    out = jax.block_until_ready(out)

    # Reference: nn.Linear semantics with matching bf16 input quantisation.
    xq = x_bf16.astype(jnp.float32)
    wq = weight.astype(jnp.bfloat16).astype(jnp.float32)
    ref = xq @ wq.T + bias

    assert out.shape == (B, S, P)
    assert out.dtype == x_bf16.dtype
    max_err = jnp.max(jnp.abs(out.astype(jnp.float32) - ref))
    assert jnp.allclose(out.astype(jnp.float32), ref, atol=5e-2, rtol=5e-2), max_err

    print("KERNEL_OK")
</pallas_src>

<mosaic_0001>
module attributes {stable_mosaic.version = 11 : i64} {
  func.func @_projector_kernel(%arg0: i32, %arg1: i32, %arg2: memref<16x32xbf16, #tpu.memory_space<vmem>>, %arg3: memref<32x64xbf16, #tpu.memory_space<vmem>>, %arg4: memref<1x64xf32, #tpu.memory_space<vmem>>, %arg5: memref<16x64xbf16, #tpu.memory_space<vmem>>) attributes {dimension_semantics = [#tpu.dimension_semantics<parallel>, #tpu.dimension_semantics<parallel>], iteration_bounds = array<i64: 1, 1>, scalar_prefetch = 0 : i64, scratch_operands = 0 : i64, tpu.core_type = #tpu.core_type<tc>, window_params = [{transform_indices = @transform_0, window_bounds = array<i64: 16, 32>}, {transform_indices = @transform_1, window_bounds = array<i64: 32, 64>}, {transform_indices = @transform_2, window_bounds = array<i64: 1, 64>}, {transform_indices = @transform_3, window_bounds = array<i64: 16, 64>}]} {
    %c0 = arith.constant 0 : index
    %c0_0 = arith.constant 0 : index
    %0 = vector.load %arg2[%c0, %c0_0] : memref<16x32xbf16, #tpu.memory_space<vmem>>, vector<16x32xbf16>
    %c0_1 = arith.constant 0 : index
    %c0_2 = arith.constant 0 : index
    %1 = vector.load %arg3[%c0_1, %c0_2] : memref<32x64xbf16, #tpu.memory_space<vmem>>, vector<32x64xbf16>
    %cst = arith.constant dense<0.000000e+00> : vector<16x64xf32>
    %2 = tpu.matmul %0, %1, %cst {dimension_numbers = #tpu.dot_dimension_numbers<[1], [0], [0], [1], [0, 0, 1, 1], [], []>} : vector<16x32xbf16>, vector<32x64xbf16>, vector<16x64xf32> -> vector<16x64xf32>
    %c0_3 = arith.constant 0 : index
    %c0_4 = arith.constant 0 : index
    %3 = vector.load %arg4[%c0_3, %c0_4] : memref<1x64xf32, #tpu.memory_space<vmem>>, vector<1x64xf32>
    %4 = vector.broadcast %3 : vector<1x64xf32> to vector<16x64xf32>
    %5 = arith.addf %2, %4 : vector<16x64xf32>
    %6 = arith.truncf %5 : vector<16x64xf32> to vector<16x64xbf16>
    %c0_5 = arith.constant 0 : index
    %c0_6 = arith.constant 0 : index
    %7 = vector.load %arg5[%c0_5, %c0_6] : memref<16x64xbf16, #tpu.memory_space<vmem>>, vector<16x64xbf16>
    tpu.vector_store %arg5[%c0_5, %c0_6], %6 {strides = array<i32>} : memref<16x64xbf16, #tpu.memory_space<vmem>>, vector<16x64xbf16>,
    return
  }
  func.func @transform_0(%arg0: i32, %arg1: i32) -> (i32, i32) {
    %c0_i32 = arith.constant 0 : i32
    %c0_i32_0 = arith.constant 0 : i32
    return %arg1, %c0_i32 : i32, i32
  }
  func.func @transform_1(%arg0: i32, %arg1: i32) -> (i32, i32) {
    %c0_i32 = arith.constant 0 : i32
    %c0_i32_0 = arith.constant 0 : i32
    return %c0_i32, %arg0 : i32, i32
  }
  func.func @transform_2(%arg0: i32, %arg1: i32) -> (i32, i32) {
    %c0_i32 = arith.constant 0 : i32
    %c0_i32_0 = arith.constant 0 : i32
    return %c0_i32, %arg0 : i32, i32
  }
  func.func @transform_3(%arg0: i32, %arg1: i32) -> (i32, i32) {
    %c0_i32 = arith.constant 0 : i32
    return %arg1, %arg0 : i32, i32
  }
}

</mosaic_0001>

<llo_original>
// kernel: tpu_custom_call.1
$region0: #{tpu_custom_call.1}
  #allocation0 [shape = 'u32[]', space=smem, size = 0x4, offset = 0x4, fixed_abs, tag = 'smem constant byte address 0x4 - core index']
  #allocation1 [shape = 'u32[72,128]{1,0:T(1,128)}', space=vmem, size = 0x9000, scoped, tag = 'internal scratch']
  %s0 = inlined_call_operand.hbm [shape: bf16[16,32], index: 0, kind: input, shape index: {}]
  %s1 = inlined_call_operand.hbm [shape: bf16[32,64], index: 1, kind: input, shape index: {}]
  %s2 = inlined_call_operand.vmem [shape: f32[1,64], index: 2, kind: input, shape index: {}]
  %s3 = inlined_call_operand.hbm [shape: bf16[16,64], index: 3, kind: output, shape index: {}]
  %s4 = sld [smem:[#allocation0]]
  $region30: #{tpu_custom_call.1} parent=0
    _
  %s6 = ssub.s32 1, %s4
  %s7 = scalar_select 0, %s6, %s4
  $region1: #{tpu_custom_call.1} parent=0
    #allocation2 [shape = 'u8[4096]{0}', space=vmem, size = 0x1000, scoped, tag = 'input window, operand 0, single buffered']
    #allocation3 [shape = 's32[1]{0}', space=sflag, size = 0x4, scoped, tag = 'scoped memory for tpu_custom_call.1']
    #allocation4 [shape = 's32[1]{0}', space=sflag, size = 0x4, scoped, tag = 'scoped memory for tpu_custom_call.1']
    #allocation5 [shape = 'u8[8192]{0}', space=vmem, size = 0x2000, scoped, tag = 'input window, operand 1, single buffered']
    #allocation6 [shape = 's32[1]{0}', space=sflag, size = 0x4, scoped, tag = 'scoped memory for tpu_custom_call.1']
    #allocation7 [shape = 'u8[4096]{0}', space=vmem, size = 0x1000, scoped, tag = 'output window, operand 0, single buffered']
    %8 = vsyncpa [#allocation3], 0
    %9 = vsyncpa [#allocation6], 0
    %10 = vsyncpa [#allocation4], 0
    // Predicated region
    $region2: #{tpu_custom_call.1} parent=1 // pred_check
      _
    $region3: #{tpu_custom_call.1} parent=1 // pred_check_branch
      %12 = sbr.rel (0) target = $region5
    $region4: #{tpu_custom_call.1} parent=1 // pred_region
      %14 = vsyncadd [#allocation3], 0
      %s15 = sshll.u32 %s0, 4
      %s16 = int_to_ptr.hbm [resolvable:$true] %s15
      %s17 = sshll.u32 [#allocation2], 4
      %s18 = int_to_ptr.vmem [resolvable:$true] %s17
      %23 = dma.hbm_to_vmem [thread:$0]  %s16, 128, %s18, [#allocation3], 64, 64, 4
    $region5: #{tpu_custom_call.1} parent=1 // pred_fallthru
      _
    // Predicated region
    $region6: #{tpu_custom_call.1} parent=1 // pred_check
      _
    $region7: #{tpu_custom_call.1} parent=1 // pred_check_branch
      %25 = sbr.rel (0) target = $region9
    $region8: #{tpu_custom_call.1} parent=1 // pred_region
      %27 = vsyncadd [#allocation6], 0
      %s28 = sshll.u32 %s1, 4
      %s29 = int_to_ptr.hbm [resolvable:$true] %s28
      %s30 = sshll.u32 [#allocation5], 4
      %s31 = int_to_ptr.vmem [resolvable:$true] %s30
      %36 = dma.hbm_to_vmem [thread:$0]  %s29, 256, %s31, [#allocation6], 64, 64, 4
    $region9: #{tpu_custom_call.1} parent=1 // pred_fallthru
      _
    // Predicated region
    $region10: #{tpu_custom_call.1} parent=1 // pred_check
      _
    $region11: #{tpu_custom_call.1} parent=1 // pred_check_branch
      %38 = sbr.rel (0) target = $region13
    $region12: #{tpu_custom_call.1} parent=1 // pred_region
      _
    $region13: #{tpu_custom_call.1} parent=1 // pred_fallthru
      _
    // Predicated region
    $region14: #{tpu_custom_call.1} parent=1 // pred_check
      _
    $region15: #{tpu_custom_call.1} parent=1 // pred_check_branch
      %40 = sbr.rel (0) target = $region17
    $region16: #{tpu_custom_call.1} parent=1 // pred_region
      %42 = dma.done [#allocation3], 128
    $region17: #{tpu_custom_call.1} parent=1 // pred_fallthru
      _
    // Predicated region
    $region18: #{tpu_custom_call.1} parent=1 // pred_check
      _
    $region19: #{tpu_custom_call.1} parent=1 // pred_check_branch
      %44 = sbr.rel (0) target = $region21
    $region20: #{tpu_custom_call.1} parent=1 // pred_region
      %46 = dma.done [#allocation6], 256
    $region21: #{tpu_custom_call.1} parent=1 // pred_fallthru
      _
    %v48 = vld [vmem:[#allocation2] sm:$0xf]
    %v49 = vld [vmem:[#allocation2 + $0x4] sm:$0xf]
    %v50 = vld [vmem:[#allocation5] sm:$0xf]
    %v51 = vld [vmem:[#allocation5 + $0x4] sm:$0xf]
    %v52 = vld [vmem:[#allocation5 + $0x8] sm:$0xf]
    %v53 = vld [vmem:[#allocation5 + $0xc] sm:$0xf]
    %v54 = vld [vmem:[%s2] sm:$0x1]
    %v56 = vperm.slane %v54, 0
    %v60 = vunpack.c.l.b16 %v48
    %v61 = vunpack.c.l.b16 %v49
    %v62 = vpack.c.b16 %v61, %v60
    %v67 = vunpack.c.l.b16 %v50
    %v68 = vunpack.c.l.b16 %v51
    %v69 = vunpack.c.l.b16 %v52
    %v70 = vunpack.c.l.b16 %v53
    %v71 = vpack.c.b16 %v68, %v67
    %v72 = vpack.c.b16 %v70, %v69
    %vm75 = vcmask 261120
    %v77 = vsel %vm75, %v62, 0
    %79 = vmatpush.bf16.msra.mxu0 0
    %80 = vmatpush.bf16.msra.mxu0 0
    %81 = vmatpush.bf16.msra.mxu0 0
    %82 = vmatpush.bf16.msra.mxu0 0
    %83 = vmatpush.bf16.msra.mxu0 0
    %84 = vmatpush.bf16.msra.mxu0 0
    %85 = vmatpush.bf16.msra.mxu0 %v72
    %86 = vmatpush.bf16.msra.mxu0 %v71
    %87 = vmatmul.bf16.gmra.mxu0 %v77
    %v88 = vpop.f32.mrf.mxu0
    %v89 = vadd.f32 %v56, %v88
    %v90 = vpop.f32.mrf.mxu0
    %v91 = vadd.f32 %v56, %v90
    %92 = vdwg.mxu0
    %v93 = vpack.c.bf16 %v89, %v89
    %v94 = vpack.c.bf16 %v91, %v91
    %vm95 = vcmask 519168
    %96 = vst.msk [vmem:[#allocation7] sm:$0xf] %vm95, %v93
    %97 = vst.msk [vmem:[#allocation7 + $0x4] sm:$0xf] %vm95, %v94
    // Predicated region
    $region22: #{tpu_custom_call.1} parent=1 // pred_check
      _
    $region23: #{tpu_custom_call.1} parent=1 // pred_check_branch
      %99 = sbr.rel (0) target = $region25
    $region24: #{tpu_custom_call.1} parent=1 // pred_region
      %101 = vsyncadd [#allocation4], 0
      %s102 = sshll.u32 [#allocation7], 4
      %s103 = int_to_ptr.vmem [resolvable:$true] %s102
      %s104 = sshll.u32 %s3, 4
      %s105 = int_to_ptr.hbm [resolvable:$true] %s104
      %110 = dma.vmem_to_hbm [thread:$0]  %s103, 128, %s105, [#allocation4], 64, 64, 4
    $region25: #{tpu_custom_call.1} parent=1 // pred_fallthru
      _
    // Predicated region
    $region26: #{tpu_custom_call.1} parent=1 // pred_check
      _
    $region27: #{tpu_custom_call.1} parent=1 // pred_check_branch
      %112 = sbr.rel (0) target = $region29
    $region28: #{tpu_custom_call.1} parent=1 // pred_region
      %114 = dma.done [#allocation4], 128
    $region29: #{tpu_custom_call.1} parent=1 // pred_fallthru
      _
    %115 = vsyncpa [#allocation3], 1
    %116 = vsyncpa [#allocation6], 1
    %117 = vsyncpa [#allocation4], 1

</llo_original>
